<compile_context>
chip_gen: v5e
topology: v5e:2x2
jax: 0.10.0
libtpu: 0.0.40
codegen_flags: <defaults>
</compile_context>

<pallas_src>
import jax
import jax.numpy as jnp
from jax.experimental import pallas as pl
from jax.experimental.pallas import tpu as pltpu

LN_EPS = 1e-5  # PyTorch nn.LayerNorm default eps


def _pos_enc_ln_kernel(x_ref, pos_ref, gamma_ref, beta_ref, o_ref):
    # x_ref:     (tB, tS, H) block of input features
    # pos_ref:   (tS, H)     block of the positional-embedding table
    # gamma_ref: (1, H), beta_ref: (1, H)
    x = x_ref[...].astype(jnp.float32)            # (tB, tS, H)
    pos = pos_ref[...].astype(jnp.float32)        # (tS, H)
    z = x + pos[None, :, :]                       # broadcast over packed batch

    # Two-pass LayerNorm statistics over the hidden (lane) axis.  The centered
    # tensor is reused for the output, so this costs the same number of
    # full-tile VPU ops as the single-pass form while matching PyTorch's
    # numerics (no catastrophic cancellation for large-mean activations).
    h = z.shape[-1]
    inv_h = jnp.float32(1.0 / h)
    mean = jnp.sum(z, axis=-1, keepdims=True) * inv_h
    centered = z - mean
    var = jnp.sum(centered * centered, axis=-1, keepdims=True) * inv_h
    inv = jax.lax.rsqrt(var + LN_EPS)             # EUP slot — free here

    gamma = gamma_ref[...].astype(jnp.float32)[None, :, :]   # (1, 1, H)
    beta = beta_ref[...].astype(jnp.float32)[None, :, :]     # (1, 1, H)

    out = centered * inv * gamma + beta
    # TODO(synk): training-mode dropout (random mask + 1/(1-p) scaling) not
    # implemented; nn.Dropout is identity in eval mode.
    o_ref[...] = out.astype(o_ref.dtype)


def _tpu_tuning():
    """Generation-aware (target_block_bytes, vmem_limit_bytes)."""
    try:
        vmem_cap = pltpu.get_tpu_info().vmem_capacity_bytes
    except Exception:
        vmem_cap = 0
    if vmem_cap >= 96 * 1024 * 1024:
        # v5e / v6e: 128 MiB VMEM — fatter tiles, generous limit.
        return 4 * 1024 * 1024, 64 * 1024 * 1024
    # v7x (64 MiB VMEM per TC) or unknown: conservative budget that still
    # leaves room for the f32 intermediates + double-buffered in/out blocks.
    return 2 * 1024 * 1024, 32 * 1024 * 1024


def _pick_seq_tile(S, H, itemsize, target_bytes):
    """Sequence-tile rows: an exact multiple-of-8 divisor of S when possible."""
    row_bytes = H * itemsize
    if S * row_bytes <= target_bytes:
        return S
    target_rows = max(8, (target_bytes // row_bytes) // 8 * 8)
    target_rows = min(target_rows, S)
    # Largest multiple-of-8 divisor of S that is <= the target (no ragged tail).
    d = (target_rows // 8) * 8
    while d >= 8:
        if S % d == 0:
            return d
        d -= 8
    # No small divisor: accept a somewhat fatter exact divisor before going ragged.
    d = ((target_rows // 8) + 1) * 8
    while d <= S:
        if S % d == 0 and d * row_bytes <= 4 * target_bytes:
            return d
        d += 8
    # Ragged tail fallback (last step masked). Pos table is padded in the
    # wrapper so no block reads past max_pos.
    return target_rows


def _pick_batch_tile(B, per_batch_block_bytes, target_bytes):
    """Pack multiple batch elements per step when the per-batch tile is tiny."""
    tB = max(1, min(B, target_bytes // max(per_batch_block_bytes, 1)))
    while tB > 1 and B % tB != 0:
        tB -= 1
    return tB


def _ensure_multi_step(B, S, H, itemsize, tB, tS):
    """Guarantee >=2 grid steps on non-tiny problems so v7x's 2 TCs are fed."""
    total_bytes = B * S * H * itemsize
    if total_bytes <= 1 * 1024 * 1024:
        return tB, tS
    if pl.cdiv(S, tS) * pl.cdiv(B, tB) >= 2:
        return tB, tS
    if tB > 1:
        new_tB = tB // 2
        while new_tB > 1 and B % new_tB != 0:
            new_tB -= 1
        return max(new_tB, 1), tS
    if tS > 8:
        new_tS = max(8, (tS // 2) // 8 * 8)
        while new_tS > 8 and S % new_tS != 0:
            new_tS -= 8
        return tB, new_tS
    return tB, tS


def trainable_positional_encoding(input_feat, pos_emb, gamma, beta):
    """input_feat: (B, S, H); pos_emb: (max_pos, H); gamma/beta: (H,)."""
    B, S, H = input_feat.shape
    max_pos = pos_emb.shape[0]
    assert S <= max_pos, "sequence length exceeds max_position_embeddings"
    # NOTE: for production shapes H should be a multiple of 128 so stores are
    # fully lane-dense (unmasked vst). The kernel is correct for any H; padding
    # a small H (e.g. 32) to 128 would inflate HBM traffic 4x, so we do not pad.

    itemsize = jnp.dtype(input_feat.dtype).itemsize
    target_block_bytes, vmem_limit_bytes = _tpu_tuning()

    tS = _pick_seq_tile(S, H, itemsize, target_block_bytes)
    tB = _pick_batch_tile(B, tS * H * itemsize, target_block_bytes)
    tB, tS = _ensure_multi_step(B, S, H, itemsize, tB, tS)

    nS = pl.cdiv(S, tS)
    nB = pl.cdiv(B, tB)

    # If a ragged sequence tail would make the last pos block extend past the
    # table, zero-pad the (small) table; padded rows only feed masked outputs.
    s_cover = nS * tS
    if s_cover > max_pos:
        pos_emb = jnp.pad(pos_emb, ((0, s_cover - max_pos), (0, 0)))

    gamma2d = gamma.reshape(1, H)
    beta2d = beta.reshape(1, H)

    bytes_accessed = (
        2 * B * S * H * itemsize                       # input read + output write
        + S * H * jnp.dtype(pos_emb.dtype).itemsize    # pos table read once
        + 2 * H * jnp.dtype(gamma.dtype).itemsize      # gamma + beta
    )
    cost = pl.CostEstimate(
        flops=9 * B * S * H,
        transcendentals=B * S,
        bytes_accessed=bytes_accessed,
    )

    # Grid: sequence OUTER, batch INNER -> the pos block index (s, 0) is
    # constant across all inner batch steps, so Pallas does not re-DMA it.
    return pl.pallas_call(
        _pos_enc_ln_kernel,
        out_shape=jax.ShapeDtypeStruct((B, S, H), input_feat.dtype),
        grid_spec=pltpu.PrefetchScalarGridSpec(
            num_scalar_prefetch=0,
            grid=(nS, nB),
            in_specs=[
                pl.BlockSpec((tB, tS, H), lambda s, b: (b, s, 0)),
                # Rows sliced straight from the full embedding table by the
                # index_map — no wrapper-side pos_emb[:S] copy, and re-fetch is
                # skipped while the inner batch axis advances.
                pl.BlockSpec((tS, H), lambda s, b: (s, 0)),
                pl.BlockSpec((1, H), lambda s, b: (0, 0)),
                pl.BlockSpec((1, H), lambda s, b: (0, 0)),
            ],
            out_specs=pl.BlockSpec((tB, tS, H), lambda s, b: (b, s, 0)),
        ),
        compiler_params=pltpu.CompilerParams(
            dimension_semantics=("parallel", "parallel"),
            vmem_limit_bytes=vmem_limit_bytes,
        ),
        cost_estimate=cost,
    )(input_feat, pos_emb, gamma2d, beta2d)


def reference_jax(input_feat, pos_emb, gamma, beta):
    B, S, H = input_feat.shape
    z = input_feat.astype(jnp.float32) + pos_emb[:S][None].astype(jnp.float32)
    mean = jnp.mean(z, axis=-1, keepdims=True)
    var = jnp.mean((z - mean) ** 2, axis=-1, keepdims=True)
    normed = (z - mean) * jax.lax.rsqrt(var + LN_EPS)
    return normed * gamma + beta


if __name__ == "__main__":
    key = jax.random.PRNGKey(0)
    B, S, H = 2, 8, 32
    max_position_embeddings = 16

    k1, k2 = jax.random.split(key, 2)
    # Deterministic synthetic params matching module shapes:
    # nn.Embedding(max_pos, hidden) ~ N(0,1); LayerNorm gamma=1, beta=0.
    pos_emb = jax.random.normal(k1, (max_position_embeddings, H), jnp.float32)
    gamma = jnp.ones((H,), jnp.float32)
    beta = jnp.zeros((H,), jnp.float32)

    input_feat = jax.random.normal(k2, (B, S, H), jnp.float32)

    out = trainable_positional_encoding(input_feat, pos_emb, gamma, beta)
    out = jax.block_until_ready(out)

    ref = reference_jax(input_feat, pos_emb, gamma, beta)
    assert out.shape == (B, S, H)
    assert jnp.allclose(out, ref, atol=2e-5, rtol=1e-5), "mismatch vs reference"

    print("KERNEL_OK")
</pallas_src>

<mosaic_0001>
module attributes {stable_mosaic.version = 11 : i64} {
  func.func @_pos_enc_ln_kernel(%arg0: i32, %arg1: i32, %arg2: memref<2x8x32xf32, #tpu.memory_space<vmem>>, %arg3: memref<8x32xf32, #tpu.memory_space<vmem>>, %arg4: memref<1x32xf32, #tpu.memory_space<vmem>>, %arg5: memref<1x32xf32, #tpu.memory_space<vmem>>, %arg6: memref<2x8x32xf32, #tpu.memory_space<vmem>>) attributes {dimension_semantics = [#tpu.dimension_semantics<parallel>, #tpu.dimension_semantics<parallel>], iteration_bounds = array<i64: 1, 1>, scalar_prefetch = 0 : i64, scratch_operands = 0 : i64, tpu.core_type = #tpu.core_type<tc>, window_params = [{transform_indices = @transform_0, window_bounds = array<i64: 2, 8, 32>}, {transform_indices = @transform_1, window_bounds = array<i64: 8, 32>}, {pipeline_mode = #tpu.pipeline_mode<synchronous>, transform_indices = @transform_2, window_bounds = array<i64: 1, 32>}, {pipeline_mode = #tpu.pipeline_mode<synchronous>, transform_indices = @transform_3, window_bounds = array<i64: 1, 32>}, {transform_indices = @transform_4, window_bounds = array<i64: 2, 8, 32>}]} {
    %c0 = arith.constant 0 : index
    %c0_0 = arith.constant 0 : index
    %c0_1 = arith.constant 0 : index
    %0 = vector.load %arg2[%c0, %c0_0, %c0_1] : memref<2x8x32xf32, #tpu.memory_space<vmem>>, vector<2x8x32xf32>
    %c0_2 = arith.constant 0 : index
    %c0_3 = arith.constant 0 : index
    %1 = vector.load %arg3[%c0_2, %c0_3] : memref<8x32xf32, #tpu.memory_space<vmem>>, vector<8x32xf32>
    %2 = vector.shape_cast %1 : vector<8x32xf32> to vector<1x8x32xf32>
    %3 = vector.broadcast %2 : vector<1x8x32xf32> to vector<2x8x32xf32>
    %4 = arith.addf %0, %3 : vector<2x8x32xf32>
    %cst = arith.constant dense<0.000000e+00> : vector<2x8xf32>
    %5 = vector.multi_reduction <add>, %4, %cst [2] : vector<2x8x32xf32> to vector<2x8xf32>
    %6 = vector.shape_cast %5 : vector<2x8xf32> to vector<2x8x1xf32>
    %cst_4 = arith.constant 3.125000e-02 : f32
    %7 = vector.broadcast %cst_4 : f32 to vector<2x8x1xf32>
    %8 = arith.mulf %6, %7 : vector<2x8x1xf32>
    %9 = vector.broadcast %8 : vector<2x8x1xf32> to vector<2x8x32xf32>
    %10 = arith.subf %4, %9 : vector<2x8x32xf32>
    %11 = arith.mulf %10, %10 : vector<2x8x32xf32>
    %cst_5 = arith.constant dense<0.000000e+00> : vector<2x8xf32>
    %12 = vector.multi_reduction <add>, %11, %cst_5 [2] : vector<2x8x32xf32> to vector<2x8xf32>
    %13 = vector.shape_cast %12 : vector<2x8xf32> to vector<2x8x1xf32>
    %cst_6 = arith.constant 3.125000e-02 : f32
    %14 = vector.broadcast %cst_6 : f32 to vector<2x8x1xf32>
    %15 = arith.mulf %13, %14 : vector<2x8x1xf32>
    %cst_7 = arith.constant 9.99999974E-6 : f32
    %16 = vector.broadcast %cst_7 : f32 to vector<2x8x1xf32>
    %17 = arith.addf %15, %16 : vector<2x8x1xf32>
    %18 = math.rsqrt %17 : vector<2x8x1xf32>
    %c0_8 = arith.constant 0 : index
    %c0_9 = arith.constant 0 : index
    %19 = vector.load %arg4[%c0_8, %c0_9] : memref<1x32xf32, #tpu.memory_space<vmem>>, vector<1x32xf32>
    %20 = vector.shape_cast %19 : vector<1x32xf32> to vector<1x1x32xf32>
    %c0_10 = arith.constant 0 : index
    %c0_11 = arith.constant 0 : index
    %21 = vector.load %arg5[%c0_10, %c0_11] : memref<1x32xf32, #tpu.memory_space<vmem>>, vector<1x32xf32>
    %22 = vector.shape_cast %21 : vector<1x32xf32> to vector<1x1x32xf32>
    %23 = vector.broadcast %18 : vector<2x8x1xf32> to vector<2x8x32xf32>
    %24 = arith.mulf %10, %23 : vector<2x8x32xf32>
    %25 = vector.broadcast %20 : vector<1x1x32xf32> to vector<2x8x32xf32>
    %26 = arith.mulf %24, %25 : vector<2x8x32xf32>
    %27 = vector.broadcast %22 : vector<1x1x32xf32> to vector<2x8x32xf32>
    %28 = arith.addf %26, %27 : vector<2x8x32xf32>
    %c0_12 = arith.constant 0 : index
    %c0_13 = arith.constant 0 : index
    %c0_14 = arith.constant 0 : index
    %29 = vector.load %arg6[%c0_12, %c0_13, %c0_14] : memref<2x8x32xf32, #tpu.memory_space<vmem>>, vector<2x8x32xf32>
    tpu.vector_store %arg6[%c0_12, %c0_13, %c0_14], %28 {strides = array<i32>} : memref<2x8x32xf32, #tpu.memory_space<vmem>>, vector<2x8x32xf32>,
    return
  }
  func.func @transform_0(%arg0: i32, %arg1: i32) -> (i32, i32, i32) {
    %c0_i32 = arith.constant 0 : i32
    %c0_i32_0 = arith.constant 0 : i32
    return %arg1, %arg0, %c0_i32 : i32, i32, i32
  }
  func.func @transform_1(%arg0: i32, %arg1: i32) -> (i32, i32) {
    %c0_i32 = arith.constant 0 : i32
    %c0_i32_0 = arith.constant 0 : i32
    return %arg0, %c0_i32 : i32, i32
  }
  func.func @transform_2(%arg0: i32, %arg1: i32) -> (i32, i32) {
    %c0_i32 = arith.constant 0 : i32
    %c0_i32_0 = arith.constant 0 : i32
    %c0_i32_1 = arith.constant 0 : i32
    return %c0_i32, %c0_i32_0 : i32, i32
  }
  func.func @transform_3(%arg0: i32, %arg1: i32) -> (i32, i32) {
    %c0_i32 = arith.constant 0 : i32
    %c0_i32_0 = arith.constant 0 : i32
    %c0_i32_1 = arith.constant 0 : i32
    return %c0_i32, %c0_i32_0 : i32, i32
  }
  func.func @transform_4(%arg0: i32, %arg1: i32) -> (i32, i32, i32) {
    %c0_i32 = arith.constant 0 : i32
    %c0_i32_0 = arith.constant 0 : i32
    return %arg1, %arg0, %c0_i32 : i32, i32, i32
  }
}

</mosaic_0001>

<llo_original>
// kernel: tpu_custom_call.1
$region0: #{tpu_custom_call.1}
  #allocation0 [shape = 'u32[]', space=smem, size = 0x4, offset = 0x4, fixed_abs, tag = 'smem constant byte address 0x4 - core index']
  #allocation1 [shape = 'u32[72,128]{1,0:T(1,128)}', space=vmem, size = 0x9000, scoped, tag = 'internal scratch']
  %s0 = inlined_call_operand.hbm [shape: f32[2,8,32], index: 0, kind: input, shape index: {}]
  %s1 = inlined_call_operand.hbm [shape: f32[16,32], index: 1, kind: input, shape index: {}]
  %s2 = inlined_call_operand.vmem [shape: f32[1,32], index: 2, kind: input, shape index: {}]
  %s3 = inlined_call_operand.vmem [shape: f32[1,32], index: 3, kind: input, shape index: {}]
  %s4 = inlined_call_operand.hbm [shape: f32[2,8,32], index: 4, kind: output, shape index: {}]
  %s5 = sld [smem:[#allocation0]]
  $region34: #{tpu_custom_call.1} parent=0
    _
  %s7 = ssub.s32 1, %s5
  %s8 = scalar_select 0, %s7, %s5
  $region1: #{tpu_custom_call.1} parent=0
    #allocation2 [shape = 'u8[8192]{0}', space=vmem, size = 0x2000, scoped, tag = 'input window, operand 0, single buffered']
    #allocation3 [shape = 's32[1]{0}', space=sflag, size = 0x4, scoped, tag = 'scoped memory for tpu_custom_call.1']
    #allocation4 [shape = 's32[1]{0}', space=sflag, size = 0x4, scoped, tag = 'scoped memory for tpu_custom_call.1']
    #allocation5 [shape = 'u8[4096]{0}', space=vmem, size = 0x1000, scoped, tag = 'input window, operand 1, single buffered']
    #allocation6 [shape = 's32[1]{0}', space=sflag, size = 0x4, scoped, tag = 'scoped memory for tpu_custom_call.1']
    #allocation7 [shape = 'u8[8192]{0}', space=vmem, size = 0x2000, scoped, tag = 'output window, operand 0, single buffered']
    %9 = vsyncpa [#allocation3], 0
    %10 = vsyncpa [#allocation6], 0
    %11 = vsyncpa [#allocation4], 0
    // Predicated region
    $region2: #{tpu_custom_call.1} parent=1 // pred_check
      _
    $region3: #{tpu_custom_call.1} parent=1 // pred_check_branch
      %13 = sbr.rel (0) target = $region5
    $region4: #{tpu_custom_call.1} parent=1 // pred_region
      %15 = vsyncadd [#allocation3], 0
      %s16 = sshll.u32 %s0, 4
      %s17 = int_to_ptr.hbm [resolvable:$true] %s16
      %s18 = sshll.u32 [#allocation2], 4
      %s19 = int_to_ptr.vmem [resolvable:$true] %s18
      %24 = dma.hbm_to_vmem [thread:$0]  %s17, 256, %s19, [#allocation3], 128, 128, 8
    $region5: #{tpu_custom_call.1} parent=1 // pred_fallthru
      _
    // Predicated region
    $region6: #{tpu_custom_call.1} parent=1 // pred_check
      _
    $region7: #{tpu_custom_call.1} parent=1 // pred_check_branch
      %26 = sbr.rel (0) target = $region9
    $region8: #{tpu_custom_call.1} parent=1 // pred_region
      %28 = vsyncadd [#allocation6], 0
      %s30 = sshll.u32 %s1, 4
      %s31 = int_to_ptr.hbm [resolvable:$true] %s30
      %s32 = sshll.u32 [#allocation5], 4
      %s33 = int_to_ptr.vmem [resolvable:$true] %s32
      %35 = dma.hbm_to_vmem [thread:$0]  %s31, 128, %s33, [#allocation6]
    $region9: #{tpu_custom_call.1} parent=1 // pred_fallthru
      _
    // Predicated region
    $region10: #{tpu_custom_call.1} parent=1 // pred_check
      _
    $region11: #{tpu_custom_call.1} parent=1 // pred_check_branch
      %37 = sbr.rel (0) target = $region13
    $region12: #{tpu_custom_call.1} parent=1 // pred_region
      _
    $region13: #{tpu_custom_call.1} parent=1 // pred_fallthru
      _
    // Predicated region
    $region14: #{tpu_custom_call.1} parent=1 // pred_check
      _
    $region15: #{tpu_custom_call.1} parent=1 // pred_check_branch
      %39 = sbr.rel (0) target = $region17
    $region16: #{tpu_custom_call.1} parent=1 // pred_region
      _
    $region17: #{tpu_custom_call.1} parent=1 // pred_fallthru
      _
    // Predicated region
    $region18: #{tpu_custom_call.1} parent=1 // pred_check
      _
    $region19: #{tpu_custom_call.1} parent=1 // pred_check_branch
      %41 = sbr.rel (0) target = $region21
    $region20: #{tpu_custom_call.1} parent=1 // pred_region
      %43 = dma.done [#allocation3], 256
    $region21: #{tpu_custom_call.1} parent=1 // pred_fallthru
      _
    // Predicated region
    $region22: #{tpu_custom_call.1} parent=1 // pred_check
      _
    $region23: #{tpu_custom_call.1} parent=1 // pred_check_branch
      %45 = sbr.rel (0) target = $region25
    $region24: #{tpu_custom_call.1} parent=1 // pred_region
      %47 = dma.done [#allocation6], 128
    $region25: #{tpu_custom_call.1} parent=1 // pred_fallthru
      _
    %v48 = vld [vmem:[#allocation2] sm:$0xff]
    %v49 = vld [vmem:[#allocation2 + $0x8] sm:$0xff]
    %v50 = vld [vmem:[#allocation5] sm:$0xff]
    %v51 = vadd.f32 %v48, %v50
    %v52 = vadd.f32 %v49, %v50
    %vm53 = vcmask 261120
    %v54 = vsel %vm53, %v51, 0.0
    %55 = vadd.xlane.f32.xlu0 %v54
    %v56 = vpop.xlane.xlu0 %55
    %v57 = vsel %vm53, %v52, 0.0
    %58 = vadd.xlane.f32.xlu0 %v57
    %v59 = vpop.xlane.xlu0 %58
    %v60 = vmul.f32 %v56, 0.03125
    %v61 = vmul.f32 %v59, 0.03125
    %v62 = vsub.f32 %v51, %v60
    %v63 = vsub.f32 %v52, %v61
    %v64 = vmul.f32 %v62, %v62
    %v65 = vmul.f32 %v63, %v63
    %v66 = vsel %vm53, %v64, 0.0
    %67 = vadd.xlane.f32.xlu0 %v66
    %v68 = vpop.xlane.xlu0 %67
    %v69 = vsel %vm53, %v65, 0.0
    %70 = vadd.xlane.f32.xlu0 %v69
    %v71 = vpop.xlane.xlu0 %70
    %v72 = vmul.f32 %v68, 0.03125
    %v73 = vmul.f32 %v71, 0.03125
    %v74 = vadd.f32 %v72, 1e-05
    %v75 = vadd.f32 %v73, 1e-05
    %v76 = vrsqrt.pop %v74
    %v77 = vmul.f32 %v76, %v74
    %v78 = vmul.f32 %v77, %v76
    %v79 = vmul.f32 0.5, %v78
    %v80 = vsub.f32 1.5, %v79
    %v81 = vmul.f32 %v76, %v80
    %vm82 = vweird.f32 %v74
    %vm83 = vweird.f32 %v76
    %vm84 = vmor %vm82, %vm83
    %v85 = vsel %vm84, %v76, %v81
    %v86 = vrsqrt.pop %v75
    %v87 = vmul.f32 %v86, %v75
    %v88 = vmul.f32 %v87, %v86
    %v89 = vmul.f32 0.5, %v88
    %v90 = vsub.f32 1.5, %v89
    %v91 = vmul.f32 %v86, %v90
    %vm92 = vweird.f32 %v75
    %vm93 = vweird.f32 %v86
    %vm94 = vmor %vm92, %vm93
    %v95 = vsel %vm94, %v86, %v91
    %v96 = vld [vmem:[%s2] sm:$0x1]
    %v97 = vld [vmem:[%s3] sm:$0x1]
    %v98 = vmul.f32 %v62, %v85
    %v99 = vmul.f32 %v63, %v95
    %v101 = vperm.slane %v96, 0
    %v103 = vmul.f32 %v98, %v101
    %v104 = vmul.f32 %v99, %v101
    %v106 = vperm.slane %v97, 0
    %v108 = vadd.f32 %v103, %v106
    %v109 = vadd.f32 %v104, %v106
    %110 = vst.msk [vmem:[#allocation7] sm:$0xff] %vm53, %v108
    %111 = vst.msk [vmem:[#allocation7 + $0x8] sm:$0xff] %vm53, %v109
    // Predicated region
    $region26: #{tpu_custom_call.1} parent=1 // pred_check
      _
    $region27: #{tpu_custom_call.1} parent=1 // pred_check_branch
      %113 = sbr.rel (0) target = $region29
    $region28: #{tpu_custom_call.1} parent=1 // pred_region
      %115 = vsyncadd [#allocation4], 0
      %s116 = sshll.u32 [#allocation7], 4
      %s117 = int_to_ptr.vmem [resolvable:$true] %s116
      %s118 = sshll.u32 %s4, 4
      %s119 = int_to_ptr.hbm [resolvable:$true] %s118
      %124 = dma.vmem_to_hbm [thread:$0]  %s117, 256, %s119, [#allocation4], 128, 128, 8
    $region29: #{tpu_custom_call.1} parent=1 // pred_fallthru
      _
    // Predicated region
    $region30: #{tpu_custom_call.1} parent=1 // pred_check
      _
    $region31: #{tpu_custom_call.1} parent=1 // pred_check_branch
      %126 = sbr.rel (0) target = $region33
    $region32: #{tpu_custom_call.1} parent=1 // pred_region
      %128 = dma.done [#allocation4], 256
    $region33: #{tpu_custom_call.1} parent=1 // pred_fallthru
      _
    %129 = vsyncpa [#allocation3], 1
    %130 = vsyncpa [#allocation6], 1
    %131 = vsyncpa [#allocation4], 1

</llo_original>
